<compile_context>
chip_gen: v6e
topology: v6e:2x2x1
jax: 0.10.0
libtpu: 0.0.40
codegen_flags: <defaults>
</compile_context>

<pallas_src>
import jax
import jax.numpy as jnp
import numpy as np
from jax.experimental import pallas as pl
from jax.experimental.pallas import tpu as pltpu


def _identity_kernel(x_ref, o_ref):
    # forward(x) = x
    o_ref[...] = x_ref[...]


def _sublane_multiple(dtype):
    itemsize = np.dtype(dtype).itemsize
    return {4: 8, 2: 16, 1: 32}.get(itemsize, 8)


def identity(x, *, target_block_bytes=2 * 1024 * 1024):
    """Identity forward pass (returns a copy of x) via a Pallas TPU kernel."""
    orig_shape = x.shape
    dtype = x.dtype
    n = x.size
    if n == 0:
        return x

    itemsize = np.dtype(dtype).itemsize
    sub = _sublane_multiple(dtype)   # sublane multiple for this dtype
    lane = 128

    # --- Build a lane-dense 2-D slab.
    # Prefer factoring the flat size into (rows, cols) with cols a wide multiple
    # of 128 and rows a multiple of the sublane multiple: the reshape of a
    # contiguous array is free, so no extra HBM passes from pad/slice.
    slab_rows = slab_cols = None
    for cols in (2048, 1024, 512, 256, 128):
        if n % cols == 0 and (n // cols) % sub == 0 and (n // cols) >= sub:
            slab_rows, slab_cols = n // cols, cols
            break

    needs_crop = False
    if slab_rows is None:
        # Ragged size: fall back to padding the flat vector (rare path).
        slab_cols = 512 if n >= 512 * sub else lane
        slab_rows = ((pl.cdiv(n, slab_cols) + sub - 1) // sub) * sub
        padded_n = slab_rows * slab_cols
        flat = x.reshape(-1)
        if padded_n != n:
            flat = jnp.pad(flat, (0, padded_n - n))
            needs_crop = True
        slab = flat.reshape(slab_rows, slab_cols)
    else:
        slab = x.reshape(slab_rows, slab_cols)

    # --- Pick a block a few MiB in size (amortizes per-step overhead) while
    # keeping 4 x block within v5e's 16 MiB default scoped VMEM and well inside
    # v7x's 64 MiB physical VMEM.
    bytes_per_row = slab_cols * itemsize
    tr = max(sub, (target_block_bytes // bytes_per_row) // sub * sub)
    tr = min(tr, slab_rows)
    while slab_rows % tr != 0:
        tr -= sub
    tr = max(tr, sub)

    out = pl.pallas_call(
        _identity_kernel,
        out_shape=jax.ShapeDtypeStruct((slab_rows, slab_cols), dtype),
        grid_spec=pltpu.PrefetchScalarGridSpec(
            num_scalar_prefetch=0,
            grid=(slab_rows // tr,),
            in_specs=[pl.BlockSpec((tr, slab_cols), lambda i: (i, 0))],
            out_specs=pl.BlockSpec((tr, slab_cols), lambda i: (i, 0)),
        ),
        compiler_params=pltpu.CompilerParams(
            dimension_semantics=("parallel",),
            vmem_limit_bytes=32 * 1024 * 1024,
        ),
    )(slab)

    if needs_crop:
        out = out.reshape(-1)[:n]
    return out.reshape(orig_shape)


if __name__ == "__main__":
    key = jax.random.PRNGKey(0)
    # NCHW input, small shapes consistent with the module's conv-net context.
    x = jax.random.normal(key, (2, 4, 16, 16), dtype=jnp.float32) * 4.0

    y = identity(x)
    y = jax.block_until_ready(y)

    assert y.shape == x.shape and y.dtype == x.dtype
    assert jnp.array_equal(y, x), "identity output must equal input exactly"

    print("KERNEL_OK")
</pallas_src>

<mosaic_0001>
module attributes {stable_mosaic.version = 11 : i64} {
  func.func @_identity_kernel(%arg0: i32, %arg1: memref<8x256xf32, #tpu.memory_space<vmem>>, %arg2: memref<8x256xf32, #tpu.memory_space<vmem>>) attributes {dimension_semantics = [#tpu.dimension_semantics<parallel>], iteration_bounds = array<i64: 1>, scalar_prefetch = 0 : i64, scratch_operands = 0 : i64, tpu.core_type = #tpu.core_type<tc>, window_params = [{transform_indices = @transform_0, window_bounds = array<i64: 8, 256>}, {transform_indices = @transform_1, window_bounds = array<i64: 8, 256>}]} {
    %c0 = arith.constant 0 : index
    %c0_0 = arith.constant 0 : index
    %0 = vector.load %arg1[%c0, %c0_0] : memref<8x256xf32, #tpu.memory_space<vmem>>, vector<8x256xf32>
    %c0_1 = arith.constant 0 : index
    %c0_2 = arith.constant 0 : index
    %1 = vector.load %arg2[%c0_1, %c0_2] : memref<8x256xf32, #tpu.memory_space<vmem>>, vector<8x256xf32>
    tpu.vector_store %arg2[%c0_1, %c0_2], %0 {strides = array<i32>} : memref<8x256xf32, #tpu.memory_space<vmem>>, vector<8x256xf32>,
    return
  }
  func.func @transform_0(%arg0: i32) -> (i32, i32) {
    %c0_i32 = arith.constant 0 : i32
    %c0_i32_0 = arith.constant 0 : i32
    return %arg0, %c0_i32 : i32, i32
  }
  func.func @transform_1(%arg0: i32) -> (i32, i32) {
    %c0_i32 = arith.constant 0 : i32
    %c0_i32_0 = arith.constant 0 : i32
    return %arg0, %c0_i32 : i32, i32
  }
}

</mosaic_0001>

<llo_original>
// kernel: tpu_custom_call.1
$region0: #{tpu_custom_call.1}
  #allocation0 [shape = 'u32[]', space=smem, size = 0x4, offset = 0x4, fixed_abs, tag = 'smem constant byte address 0x4 - core index']
  #allocation1 [shape = 'u32[144,128]{1,0:T(1,128)}', space=vmem, size = 0x12000, scoped, tag = 'internal scratch']
  %s0 = inlined_call_operand.hbm [shape: f32[8,256], index: 0, kind: input, shape index: {}]
  %s1 = inlined_call_operand.hbm [shape: f32[8,256], index: 1, kind: output, shape index: {}]
  %s2 = sld [smem:[#allocation0]]
  $region18: #{tpu_custom_call.1} parent=0
    _
  %s4 = ssub.s32 1, %s2
  %s5 = scalar_select 0, %s4, %s2
  $region1: #{tpu_custom_call.1} parent=0
    #allocation2 [shape = 'u8[8192]{0}', space=vmem, size = 0x2000, scoped, tag = 'input window, operand 0, single buffered']
    #allocation3 [shape = 's32[1]{0}', space=sflag, size = 0x4, scoped, tag = 'scoped memory for tpu_custom_call.1']
    #allocation4 [shape = 's32[1]{0}', space=sflag, size = 0x4, scoped, tag = 'scoped memory for tpu_custom_call.1']
    #allocation5 [shape = 'u8[8192]{0}', space=vmem, size = 0x2000, scoped, tag = 'output window, operand 0, single buffered']
    %6 = vsyncpa [#allocation3], 0
    %7 = vsyncpa [#allocation4], 0
    // Predicated region
    $region2: #{tpu_custom_call.1} parent=1 // pred_check
      _
    $region3: #{tpu_custom_call.1} parent=1 // pred_check_branch
      %9 = sbr.rel (0) target = $region5
    $region4: #{tpu_custom_call.1} parent=1 // pred_region
      %s11 = ssub.s32 256, 256
      %12 = vsyncadd [#allocation3], %s11
      %s14 = sshll.u32 [#allocation2], 4
      %s15 = int_to_ptr.vmem [resolvable:$true] %s14
      %17 = dma.hbm_to_vmem [thread:$0]  %s0, 256, %s15, [#allocation3]
    $region5: #{tpu_custom_call.1} parent=1 // pred_fallthru
      _
    // Predicated region
    $region6: #{tpu_custom_call.1} parent=1 // pred_check
      _
    $region7: #{tpu_custom_call.1} parent=1 // pred_check_branch
      %19 = sbr.rel (0) target = $region9
    $region8: #{tpu_custom_call.1} parent=1 // pred_region
      %20 = dma.done [#allocation3], 256
    $region9: #{tpu_custom_call.1} parent=1 // pred_fallthru
      _
    %v21 = vld [vmem:[#allocation2] sm:$0xff]
    %v22 = vld [vmem:[#allocation2 + $0x8] sm:$0xff]
    %23 = vst [vmem:[#allocation5] sm:$0xff] %v21
    %24 = vst [vmem:[#allocation5 + $0x8] sm:$0xff] %v22
    // Predicated region
    $region10: #{tpu_custom_call.1} parent=1 // pred_check
      _
    $region11: #{tpu_custom_call.1} parent=1 // pred_check_branch
      %26 = sbr.rel (0) target = $region13
    $region12: #{tpu_custom_call.1} parent=1 // pred_region
      %s28 = ssub.s32 256, 256
      %29 = vsyncadd [#allocation4], %s28
      %s31 = sshll.u32 [#allocation5], 4
      %s32 = int_to_ptr.vmem [resolvable:$true] %s31
      %34 = dma.vmem_to_hbm [thread:$0]  %s32, 256, %s1, [#allocation4]
    $region13: #{tpu_custom_call.1} parent=1 // pred_fallthru
      _
    // Predicated region
    $region14: #{tpu_custom_call.1} parent=1 // pred_check
      _
    $region15: #{tpu_custom_call.1} parent=1 // pred_check_branch
      %36 = sbr.rel (0) target = $region17
    $region16: #{tpu_custom_call.1} parent=1 // pred_region
      %37 = dma.done [#allocation4], 256
    $region17: #{tpu_custom_call.1} parent=1 // pred_fallthru
      _
    %38 = vsyncpa [#allocation3], 1
    %39 = vsyncpa [#allocation4], 1

</llo_original>
